<compile_context>
chip_gen: v7x
topology: tpu7x:2x2x1
jax: 0.10.0
libtpu: 0.0.40
codegen_flags: <defaults>
</compile_context>

<pallas_src>
import jax
import jax.numpy as jnp
import numpy as np
from jax.experimental import pallas as pl
from jax.experimental.pallas import tpu as pltpu

_EPS = 1e-5


# ----------------------------- Pass A: statistics ----------------------------
def _stats_kernel(x_ref, wr_ref, wi_ref, stats_ref):
    @pl.when(pl.program_id(0) == 0)
    def _():
        stats_ref[...] = jnp.zeros_like(stats_ref)

    x = x_ref[...]                                                   # (TM, 2Cin)
    yr = jnp.dot(x, wr_ref[...], preferred_element_type=jnp.float32)  # (TM, 4C)
    yi = jnp.dot(x, wi_ref[...], preferred_element_type=jnp.float32)

    sr = jnp.sum(yr, axis=0, keepdims=True)
    si = jnp.sum(yi, axis=0, keepdims=True)
    srr = jnp.sum(yr * yr, axis=0, keepdims=True)
    sii = jnp.sum(yi * yi, axis=0, keepdims=True)
    sri = jnp.sum(yr * yi, axis=0, keepdims=True)
    zero = jnp.zeros_like(sr)
    stats_ref[...] += jnp.concatenate(
        [sr, si, srr, sii, sri, zero, zero, zero], axis=0)            # (8, 4C)


# --------------------- Pass B: conv + BN + ReLU + dropout --------------------
def _apply_kernel(x_ref, wr_ref, wi_ref, coef_ref, outr_ref, outi_ref):
    x = x_ref[...]                                                   # (TM, 2Cin)
    yr = jnp.dot(x, wr_ref[...], preferred_element_type=jnp.float32)  # (TM, 4C)
    yi = jnp.dot(x, wi_ref[...], preferred_element_type=jnp.float32)

    c = coef_ref[0]                    # (8, 4C): [a_rr, a_ri, d_r, a_ir, a_ii, d_i, 0, 0]
    zr = c[0:1, :] * yr + c[1:2, :] * yi + c[2:3, :]
    zi = c[3:4, :] * yr + c[4:5, :] * yi + c[5:6, :]
    outr_ref[...] = jnp.maximum(zr, 0.0)          # ReLU; dropout already folded
    outi_ref[...] = jnp.maximum(zi, 0.0)          # into the coefficients.


def _pick_tile_rows(hw, target=1024):
    """Largest multiple of 8 that divides H*W and is <= target."""
    best = 0
    for d in range(8, min(hw, target) + 1, 8):
        if hw % d == 0:
            best = d
    return best


def complex_transpose_conv_block(x, params, drop_mask_nc):
    """x: complex64 (N, Cin, H, W) -> complex64 (N, Cout, 2H, 2W)."""
    N, Cin, H, W = x.shape
    Cout = params["wr"].shape[1]
    HW = H * W
    M = N * HW
    C4 = 4 * Cout

    assert HW % 8 == 0, "H*W must be a multiple of 8 for the tiled kernel"
    TM = _pick_tile_rows(HW)
    blocks_per_image = HW // TM
    num_tiles = M // TM

    # ---- pack input: pixels-as-rows, [real | imag] along K ------------------
    xr = jnp.transpose(jnp.real(x), (0, 2, 3, 1)).reshape(M, Cin)
    xi = jnp.transpose(jnp.imag(x), (0, 2, 3, 1)).reshape(M, Cin)
    x_packed = jnp.concatenate([xr, xi], axis=1).astype(jnp.float32)   # (M, 2Cin)

    # ---- fused complex/tap weights: columns ordered (p = kh*2+kw, c) --------
    def taps(w):  # (Cin, Cout, 2, 2) -> (Cin, 4*Cout)
        w = jnp.transpose(w, (2, 3, 0, 1)).reshape(4, Cin, Cout)
        return jnp.transpose(w, (1, 0, 2)).reshape(Cin, C4)

    wr_taps = taps(params["wr"])
    wi_taps = taps(params["wi"])
    w_real = jnp.concatenate([wr_taps, -wi_taps], axis=0).astype(jnp.float32)
    w_imag = jnp.concatenate([wi_taps, wr_taps], axis=0).astype(jnp.float32)

    grid = (num_tiles,)
    x_spec = pl.BlockSpec((TM, 2 * Cin), lambda i: (i, 0))
    w_spec = pl.BlockSpec((2 * Cin, C4), lambda i: (0, 0))

    # ------------------------- Pass A: moments -------------------------------
    stats = pl.pallas_call(
        _stats_kernel,
        grid=grid,
        in_specs=[x_spec, w_spec, w_spec],
        out_specs=pl.BlockSpec((8, C4), lambda i: (0, 0)),
        out_shape=jax.ShapeDtypeStruct((8, C4), jnp.float32),
        compiler_params=pltpu.CompilerParams(
            dimension_semantics=("arbitrary",)),
    )(x_packed, w_real, w_imag)

    # ---- tiny JAX glue: fold BN whitening + affine + dropout into 6 rows ----
    S = stats[:5].reshape(5, 4, Cout).sum(axis=1)          # fold taps -> (5, Cout)
    nelem = 4.0 * M                                        # N * 2H * 2W
    mu_r, mu_i = S[0] / nelem, S[1] / nelem                # raw (bias-free) means
    crr = S[2] / nelem - mu_r * mu_r + _EPS
    cii = S[3] / nelem - mu_i * mu_i + _EPS
    cri = S[4] / nelem - mu_r * mu_i
    s = jnp.sqrt(crr * cii - cri * cri)
    t = jnp.sqrt(crr + cii + 2.0 * s)
    inv_st = 1.0 / (s * t)
    rrr, rii, rri = (cii + s) * inv_st, (crr + s) * inv_st, -cri * inv_st

    wrr, wii, wri = params["bn_wrr"], params["bn_wii"], params["bn_wri"]
    a_rr = wrr * rrr + wri * rri
    a_ri = wrr * rri + wri * rii
    a_ir = wri * rrr + wii * rri
    a_ii = wri * rri + wii * rii
    # The ConvTranspose bias is a per-channel constant, so it cancels exactly in
    # the centered BN statistics; only the raw-matmul means enter the offsets.
    d_r = params["bn_br"] - a_rr * mu_r - a_ri * mu_i
    d_i = params["bn_bi"] - a_ir * mu_r - a_ii * mu_i

    def lane_tile(v):                       # (Cout,) -> (4*Cout,), matches (p, c) cols
        return jnp.tile(v, 4)

    # Dropout2d: relu(z)*m == relu(z*m) for m >= 0, so fold the per-(n, channel)
    # mask into the per-n coefficient rows (no per-pixel mask materialization).
    mask4 = jnp.tile(drop_mask_nc.astype(jnp.float32), (1, 4))        # (N, 4C)
    rows = [lane_tile(a_rr), lane_tile(a_ri), lane_tile(d_r),
            lane_tile(a_ir), lane_tile(a_ii), lane_tile(d_i)]
    coef = jnp.stack([r[None, :] * mask4 for r in rows]
                     + [jnp.zeros_like(mask4), jnp.zeros_like(mask4)],
                     axis=1).astype(jnp.float32)                      # (N, 8, 4C)

    # ------------------------- Pass B: apply ----------------------------------
    coef_spec = pl.BlockSpec((1, 8, C4), lambda i: (i // blocks_per_image, 0, 0))
    out_spec = pl.BlockSpec((TM, C4), lambda i: (i, 0))
    out_r, out_i = pl.pallas_call(
        _apply_kernel,
        grid=grid,
        in_specs=[x_spec, w_spec, w_spec, coef_spec],
        out_specs=[out_spec, out_spec],
        out_shape=[jax.ShapeDtypeStruct((M, C4), jnp.float32),
                   jax.ShapeDtypeStruct((M, C4), jnp.float32)],
        compiler_params=pltpu.CompilerParams(
            dimension_semantics=("parallel",)),
    )(x_packed, w_real, w_imag, coef)

    # ---- scatter (kh, kw) taps back onto the upsampled NCHW grid ------------
    def assemble(y):
        y = y.reshape(N, H, W, 2, 2, Cout)          # rows (n,h,w), cols (kh,kw,c)
        y = jnp.transpose(y, (0, 5, 1, 3, 2, 4))    # (N, Cout, H, kh, W, kw)
        return y.reshape(N, Cout, 2 * H, 2 * W)

    return assemble(out_r) + 1j * assemble(out_i)


# ------------------------------ pure-JAX reference ----------------------------
def reference_forward(x, params, drop_mask_nc):
    wr, wi = params["wr"], params["wi"]
    br, bi = params["br"], params["bi"]
    xr, xi = jnp.real(x), jnp.imag(x)
    hp = jax.lax.Precision.HIGHEST

    def conv_t(a, w):
        y = jnp.einsum("ncij,cokl->noikjl", a, w, precision=hp)
        n, co, h, _, wd, _ = y.shape
        return y.reshape(n, co, 2 * h, 2 * wd)

    yr = conv_t(xr, wr) - conv_t(xi, wi) + (br - bi)[None, :, None, None]
    yi = conv_t(xi, wr) + conv_t(xr, wi) + (br + bi)[None, :, None, None]

    eps = 1e-5
    mu_r = yr.mean((0, 2, 3), keepdims=True)
    mu_i = yi.mean((0, 2, 3), keepdims=True)
    cr, ci = yr - mu_r, yi - mu_i
    crr = (cr * cr).mean((0, 2, 3), keepdims=True) + eps
    cii = (ci * ci).mean((0, 2, 3), keepdims=True) + eps
    cri = (cr * ci).mean((0, 2, 3), keepdims=True)
    s = jnp.sqrt(crr * cii - cri * cri)
    t = jnp.sqrt(crr + cii + 2.0 * s)
    inv_st = 1.0 / (s * t)
    rrr, rii, rri = (cii + s) * inv_st, (crr + s) * inv_st, -cri * inv_st
    xh_r = rrr * cr + rri * ci
    xh_i = rii * ci + rri * cr

    wrr = params["bn_wrr"][None, :, None, None]
    wii = params["bn_wii"][None, :, None, None]
    wri = params["bn_wri"][None, :, None, None]
    bbr = params["bn_br"][None, :, None, None]
    bbi = params["bn_bi"][None, :, None, None]
    zr = wrr * xh_r + wri * xh_i + bbr
    zi = wri * xh_r + wii * xh_i + bbi
    zr = jnp.maximum(zr, 0.0)
    zi = jnp.maximum(zi, 0.0)
    m = drop_mask_nc.astype(jnp.float32)[:, :, None, None]
    return (zr * m) + 1j * (zi * m)


if __name__ == "__main__":
    N, Cin, Cout, H, W = 2, 4, 8, 16, 16
    drop_prob = 0.25

    key = jax.random.PRNGKey(0)
    ks = jax.random.split(key, 12)
    x = (jax.random.normal(ks[0], (N, Cin, H, W), jnp.float32)
         + 1j * jax.random.normal(ks[1], (N, Cin, H, W), jnp.float32))

    inv_sqrt2 = 1.0 / jnp.sqrt(2.0)
    params = {
        "wr": 0.2 * jax.random.normal(ks[2], (Cin, Cout, 2, 2), jnp.float32),
        "wi": 0.2 * jax.random.normal(ks[3], (Cin, Cout, 2, 2), jnp.float32),
        "br": 0.1 * jax.random.normal(ks[4], (Cout,), jnp.float32),
        "bi": 0.1 * jax.random.normal(ks[5], (Cout,), jnp.float32),
        "bn_wrr": inv_sqrt2 + 0.05 * jax.random.normal(ks[6], (Cout,), jnp.float32),
        "bn_wii": inv_sqrt2 + 0.05 * jax.random.normal(ks[7], (Cout,), jnp.float32),
        "bn_wri": 0.05 * jax.random.normal(ks[8], (Cout,), jnp.float32),
        "bn_br": 0.05 * jax.random.normal(ks[9], (Cout,), jnp.float32),
        "bn_bi": 0.05 * jax.random.normal(ks[10], (Cout,), jnp.float32),
    }
    # TODO(synk): torch's Dropout2d RNG stream cannot be reproduced bit-exactly;
    # the per-(n, channel) mask is generated deterministically with jax.random.
    keep = jax.random.bernoulli(ks[11], 1.0 - drop_prob, (N, Cout))
    drop_mask = keep.astype(jnp.float32) / (1.0 - drop_prob)

    out = complex_transpose_conv_block(x, params, drop_mask)
    out = jax.block_until_ready(out)

    assert out.shape == (N, Cout, 2 * H, 2 * W)
    assert out.dtype == jnp.complex64

    ref = reference_forward(x, params, drop_mask)
    np.testing.assert_allclose(np.asarray(out.real), np.asarray(ref.real),
                               rtol=5e-3, atol=5e-3)
    np.testing.assert_allclose(np.asarray(out.imag), np.asarray(ref.imag),
                               rtol=5e-3, atol=5e-3)
    print("KERNEL_OK")
</pallas_src>

<mosaic_0001>
module attributes {stable_mosaic.version = 11 : i64} {
  func.func @_stats_kernel(%arg0: i32, %arg1: memref<256x8xf32, #tpu.memory_space<vmem>>, %arg2: memref<8x32xf32, #tpu.memory_space<vmem>>, %arg3: memref<8x32xf32, #tpu.memory_space<vmem>>, %arg4: memref<8x32xf32, #tpu.memory_space<vmem>>) attributes {dimension_semantics = [#tpu.dimension_semantics<arbitrary>], iteration_bounds = array<i64: 2>, scalar_prefetch = 0 : i64, scratch_operands = 0 : i64, tpu.core_type = #tpu.core_type<tc>, window_params = [{transform_indices = @transform_0, window_bounds = array<i64: 256, 8>}, {pipeline_mode = #tpu.pipeline_mode<synchronous>, transform_indices = @transform_1, window_bounds = array<i64: 8, 32>}, {pipeline_mode = #tpu.pipeline_mode<synchronous>, transform_indices = @transform_2, window_bounds = array<i64: 8, 32>}, {pipeline_mode = #tpu.pipeline_mode<synchronous>, transform_indices = @transform_3, window_bounds = array<i64: 8, 32>}]} {
    %c0_i32 = arith.constant 0 : i32
    %0 = arith.cmpi eq, %arg0, %c0_i32 : i32
    %1 = arith.extui %0 : i1 to i32
    %c0_i32_0 = arith.constant 0 : i32
    %2 = arith.cmpi ne, %1, %c0_i32_0 : i32
    scf.if %2 {
      %cst_17 = arith.constant 0.000000e+00 : f32
      %26 = vector.broadcast %cst_17 : f32 to vector<8x32xf32>
      %c0_18 = arith.constant 0 : index
      %c0_19 = arith.constant 0 : index
      %27 = vector.load %arg4[%c0_18, %c0_19] : memref<8x32xf32, #tpu.memory_space<vmem>>, vector<8x32xf32>
      tpu.vector_store %arg4[%c0_18, %c0_19], %26 {strides = array<i32>} : memref<8x32xf32, #tpu.memory_space<vmem>>, vector<8x32xf32>,
    } else {
    }
    %c0 = arith.constant 0 : index
    %c0_1 = arith.constant 0 : index
    %3 = vector.load %arg1[%c0, %c0_1] : memref<256x8xf32, #tpu.memory_space<vmem>>, vector<256x8xf32>
    %c0_2 = arith.constant 0 : index
    %c0_3 = arith.constant 0 : index
    %4 = vector.load %arg2[%c0_2, %c0_3] : memref<8x32xf32, #tpu.memory_space<vmem>>, vector<8x32xf32>
    %cst = arith.constant dense<0.000000e+00> : vector<256x32xf32>
    %5 = tpu.matmul %3, %4, %cst {dimension_numbers = #tpu.dot_dimension_numbers<[1], [0], [0], [1], [0, 0, 1, 1], [], []>} : vector<256x8xf32>, vector<8x32xf32>, vector<256x32xf32> -> vector<256x32xf32>
    %c0_4 = arith.constant 0 : index
    %c0_5 = arith.constant 0 : index
    %6 = vector.load %arg3[%c0_4, %c0_5] : memref<8x32xf32, #tpu.memory_space<vmem>>, vector<8x32xf32>
    %cst_6 = arith.constant dense<0.000000e+00> : vector<256x32xf32>
    %7 = tpu.matmul %3, %6, %cst_6 {dimension_numbers = #tpu.dot_dimension_numbers<[1], [0], [0], [1], [0, 0, 1, 1], [], []>} : vector<256x8xf32>, vector<8x32xf32>, vector<256x32xf32> -> vector<256x32xf32>
    %cst_7 = arith.constant dense<0.000000e+00> : vector<32xf32>
    %8 = vector.multi_reduction <add>, %5, %cst_7 [0] : vector<256x32xf32> to vector<32xf32>
    %9 = vector.shape_cast %8 : vector<32xf32> to vector<1x32xf32>
    %cst_8 = arith.constant dense<0.000000e+00> : vector<32xf32>
    %10 = vector.multi_reduction <add>, %7, %cst_8 [0] : vector<256x32xf32> to vector<32xf32>
    %11 = vector.shape_cast %10 : vector<32xf32> to vector<1x32xf32>
    %12 = arith.mulf %5, %5 : vector<256x32xf32>
    %cst_9 = arith.constant dense<0.000000e+00> : vector<32xf32>
    %13 = vector.multi_reduction <add>, %12, %cst_9 [0] : vector<256x32xf32> to vector<32xf32>
    %14 = vector.shape_cast %13 : vector<32xf32> to vector<1x32xf32>
    %15 = arith.mulf %7, %7 : vector<256x32xf32>
    %cst_10 = arith.constant dense<0.000000e+00> : vector<32xf32>
    %16 = vector.multi_reduction <add>, %15, %cst_10 [0] : vector<256x32xf32> to vector<32xf32>
    %17 = vector.shape_cast %16 : vector<32xf32> to vector<1x32xf32>
    %18 = arith.mulf %5, %7 : vector<256x32xf32>
    %cst_11 = arith.constant dense<0.000000e+00> : vector<32xf32>
    %19 = vector.multi_reduction <add>, %18, %cst_11 [0] : vector<256x32xf32> to vector<32xf32>
    %20 = vector.shape_cast %19 : vector<32xf32> to vector<1x32xf32>
    %cst_12 = arith.constant 0.000000e+00 : f32
    %21 = vector.broadcast %cst_12 : f32 to vector<1x32xf32>
    %c0_13 = arith.constant 0 : index
    %c0_14 = arith.constant 0 : index
    %22 = vector.load %arg4[%c0_13, %c0_14] : memref<8x32xf32, #tpu.memory_space<vmem>>, vector<8x32xf32>
    %23 = tpu.concatenate %9, %11, %14, %17, %20, %21, %21, %21 in 0 : vector<1x32xf32>, vector<1x32xf32>, vector<1x32xf32>, vector<1x32xf32>, vector<1x32xf32>, vector<1x32xf32>, vector<1x32xf32>, vector<1x32xf32> -> vector<8x32xf32>
    %24 = arith.addf %22, %23 : vector<8x32xf32>
    %c0_15 = arith.constant 0 : index
    %c0_16 = arith.constant 0 : index
    %25 = vector.load %arg4[%c0_15, %c0_16] : memref<8x32xf32, #tpu.memory_space<vmem>>, vector<8x32xf32>
    tpu.vector_store %arg4[%c0_15, %c0_16], %24 {strides = array<i32>} : memref<8x32xf32, #tpu.memory_space<vmem>>, vector<8x32xf32>,
    return
  }
  func.func @transform_0(%arg0: i32) -> (i32, i32) {
    %c0_i32 = arith.constant 0 : i32
    %c0_i32_0 = arith.constant 0 : i32
    return %arg0, %c0_i32 : i32, i32
  }
  func.func @transform_1(%arg0: i32) -> (i32, i32) {
    %c0_i32 = arith.constant 0 : i32
    %c0_i32_0 = arith.constant 0 : i32
    %c0_i32_1 = arith.constant 0 : i32
    return %c0_i32, %c0_i32_0 : i32, i32
  }
  func.func @transform_2(%arg0: i32) -> (i32, i32) {
    %c0_i32 = arith.constant 0 : i32
    %c0_i32_0 = arith.constant 0 : i32
    %c0_i32_1 = arith.constant 0 : i32
    return %c0_i32, %c0_i32_0 : i32, i32
  }
  func.func @transform_3(%arg0: i32) -> (i32, i32) {
    %c0_i32 = arith.constant 0 : i32
    %c0_i32_0 = arith.constant 0 : i32
    %c0_i32_1 = arith.constant 0 : i32
    return %c0_i32, %c0_i32_0 : i32, i32
  }
}

</mosaic_0001>

<llo_original>
// kernel: tpu_custom_call.1
$region0: #{tpu_custom_call.1}
  #allocation0 [shape = 'u32[]', space=smem, size = 0x4, offset = 0x4, fixed_abs, tag = 'smem constant byte address 0x4 - core index']
  #allocation1 [shape = 'u32[144,128]{1,0:T(1,128)}', space=vmem, size = 0x12000, scoped, tag = 'internal scratch']
  %s0 = inlined_call_operand.vmem [shape: f32[512,8], index: 0, kind: input, shape index: {}]
  %s1 = inlined_call_operand.vmem [shape: f32[8,32], index: 1, kind: input, shape index: {}]
  %s2 = inlined_call_operand.vmem [shape: f32[8,32], index: 2, kind: input, shape index: {}]
  %s3 = inlined_call_operand.hbm [shape: f32[8,32], index: 3, kind: output, shape index: {}]
  %s4 = sld [smem:[#allocation0]]
  $region49: #{tpu_custom_call.1} parent=0
    _
  %s6 = ssub.s32 1, %s4
  %s7 = scalar_select 0, %s6, %s4
  $region1: #{tpu_custom_call.1} parent=0
    #allocation2 [shape = 'u8[4096]{0}', space=vmem, size = 0x1000, scoped, tag = 'output window, operand 0, single buffered']
    #allocation3 [shape = 's32[2]{0}', space=sflag, size = 0x8, scoped, tag = 'scoped memory for tpu_custom_call.1']
    %8 = vsyncpa [#allocation3], 0
    loop: start=0, step=1, limit=4
    $region2: #{tpu_custom_call.1} parent=1 // loop_pre_header
      _
    $region3: #{tpu_custom_call.1} parent=1 // loop_header
      %s10 = sphi 0, %s14
      %p11 = scmp.ge.s32.totalorder %s10, 4
      %s20 = sphi 0, %s22
      %s23 = sphi 0, %s20
      %s24 = sphi 0, %s23
      %s40 = sphi 0, %s24
      %s44 = sphi 0, %s44
      %s46 = sphi 0, %s44
      %s47 = sphi 0, %s46
      %s61 = sphi 0, %s47
      %s65 = sphi 0, %s65
      %s67 = sphi 0, %s65
      %s68 = sphi 0, %s67
      %s82 = sphi 0, %s68
      %s86 = sphi 0, %s86
      %s88 = sphi 0, %s86
      %s89 = sphi 0, %s88
      %s103 = sphi 0, %s89
    $region4: #{tpu_custom_call.1} parent=1 // loop_header_branch
      %13 = sbr.rel (%p11) target = $region8
    $region5: #{tpu_custom_call.1} parent=1 // loop_body
      %s15 = ssub.s32 %s10, 1
      %s16 = ssub.s32 %s10, 2
      %s17 = sadd.s32 %s10, 1
      %s18 = ssub.s32 %s10, %s17
      %p19 = scmp.eq.s32.totalorder %s18, 0
      %s21 = sadd.s32 %s20, 1
      %s22 = scalar_select %p19, %s20, %s21
      %p25 = pneg %p19
      %p26 = scmp.eq.s32.totalorder %s10, 1
      %p27 = por %p25, %p26
      %p28 = scmp.ne.s32.totalorder %s20, %s23
      %p29 = scmp.eq.s32.totalorder %s10, 0
      %p30 = por %p28, %p29
      %p31 = scmp.ne.s32.totalorder %s20, %s23
      %p32 = scmp.eq.s32.totalorder %s15, 1
      %p33 = por %p31, %p32
      %p34 = scmp.ne.s32.totalorder %s23, %s24
      %p35 = scmp.eq.s32.totalorder %s15, 0
      %p36 = por %p34, %p35
      %p37 = scmp.ne.s32.totalorder %s23, %s24
      %p38 = scmp.eq.s32.totalorder %s16, 1
      %p39 = por %p37, %p38
      %p41 = scmp.ne.s32.totalorder %s24, %s40
      %p42 = scmp.eq.s32.totalorder %s16, 0
      %p43 = por %p41, %p42
      %s45 = sadd.s32 %s44, 1
      %p48 = scmp.eq.s32.totalorder %s10, 1
      %p49 = scmp.ne.s32.totalorder %s44, %s46
      %p50 = scmp.eq.s32.totalorder %s10, 0
      %p51 = por %p49, %p50
      %p52 = scmp.ne.s32.totalorder %s44, %s46
      %p53 = scmp.eq.s32.totalorder %s15, 1
      %p54 = por %p52, %p53
      %p55 = scmp.ne.s32.totalorder %s46, %s47
      %p56 = scmp.eq.s32.totalorder %s15, 0
      %p57 = por %p55, %p56
      %p58 = scmp.ne.s32.totalorder %s46, %s47
      %p59 = scmp.eq.s32.totalorder %s16, 1
      %p60 = por %p58, %p59
      %p62 = scmp.ne.s32.totalorder %s47, %s61
      %p63 = scmp.eq.s32.totalorder %s16, 0
      %p64 = por %p62, %p63
      %s66 = sadd.s32 %s65, 1
      %p69 = scmp.eq.s32.totalorder %s10, 1
      %p70 = scmp.ne.s32.totalorder %s65, %s67
      %p71 = scmp.eq.s32.totalorder %s10, 0
      %p72 = por %p70, %p71
      %p73 = scmp.ne.s32.totalorder %s65, %s67
      %p74 = scmp.eq.s32.totalorder %s15, 1
      %p75 = por %p73, %p74
      %p76 = scmp.ne.s32.totalorder %s67, %s68
      %p77 = scmp.eq.s32.totalorder %s15, 0
      %p78 = por %p76, %p77
      %p79 = scmp.ne.s32.totalorder %s67, %s68
      %p80 = scmp.eq.s32.totalorder %s16, 1
      %p81 = por %p79, %p80
      %p83 = scmp.ne.s32.totalorder %s68, %s82
      %p84 = scmp.eq.s32.totalorder %s16, 0
      %p85 = por %p83, %p84
      %s87 = sadd.s32 %s86, 1
      %p90 = scmp.eq.s32.totalorder %s10, 1
      %p91 = scmp.ne.s32.totalorder %s86, %s88
      %p92 = scmp.eq.s32.totalorder %s10, 0
      %p93 = por %p91, %p92
      %p94 = scmp.ne.s32.totalorder %s86, %s88
      %p95 = scmp.eq.s32.totalorder %s15, 1
      %p96 = por %p94, %p95
      %p97 = scmp.ne.s32.totalorder %s88, %s89
      %p98 = scmp.eq.s32.totalorder %s15, 0
      %p99 = por %p97, %p98
      %p100 = scmp.ne.s32.totalorder %s88, %s89
      %p101 = scmp.eq.s32.totalorder %s16, 1
      %p102 = por %p100, %p101
      %p104 = scmp.ne.s32.totalorder %s89, %s103
      %p105 = scmp.eq.s32.totalorder %s16, 0
      %p106 = por %p104, %p105
      %p107 = scmp.le.s32.totalorder 1, %s10
      %p108 = scmp.lt.s32.totalorder %s10, 3
      %p109 = pnand %p107, %p108
      %p110 = pneg %p109
      // Predicated region
      $region9: #{tpu_custom_call.1} parent=5 // pred_check
        _
      $region10: #{tpu_custom_call.1} parent=5 // pred_check_branch
        %112 = sbr.rel (%p109) target = $region12
      $region11: #{tpu_custom_call.1} parent=5 // pred_region
        %s113 = ssub.s32 %s10, 1
        // Predicated region
        $region13: #{tpu_custom_call.1} parent=11 // pred_check
          %p114 = pneg %p57
        $region14: #{tpu_custom_call.1} parent=11 // pred_check_branch
          %116 = sbr.rel (%p114) target = $region16
        $region15: #{tpu_custom_call.1} parent=11 // pred_region
          _
        $region16: #{tpu_custom_call.1} parent=11 // pred_fallthru
          _
        // Predicated region
        $region17: #{tpu_custom_call.1} parent=11 // pred_check
          %p117 = pneg %p78
        $region18: #{tpu_custom_call.1} parent=11 // pred_check_branch
          %119 = sbr.rel (%p117) target = $region20
        $region19: #{tpu_custom_call.1} parent=11 // pred_region
          _
        $region20: #{tpu_custom_call.1} parent=11 // pred_fallthru
          _
      $region12: #{tpu_custom_call.1} parent=5 // pred_fallthru
        _
      %p120 = scmp.lt.s32.totalorder %s10, 2
      // Predicated region
      $region21: #{tpu_custom_call.1} parent=5 // pred_check
        %p121 = pneg %p120
      $region22: #{tpu_custom_call.1} parent=5 // pred_check_branch
        %123 = sbr.rel (%p121) target = $region24
      $region23: #{tpu_custom_call.1} parent=5 // pred_region
        // Predicated region
        $region25: #{tpu_custom_call.1} parent=23 // pred_check
          %p124 = pneg %p30
        $region26: #{tpu_custom_call.1} parent=23 // pred_check_branch
          %126 = sbr.rel (%p124) target = $region28
        $region27: #{tpu_custom_call.1} parent=23 // pred_region
          %s127 = smul.u32 32, %s10
          %p128 = scmp.lt.s32.totalorder %s127, 63
          %s129 = scalar_select %p128, %s127, 63
          %s130 = smul.addr %s129, 8
          %s131 = scalar_lea.vmem %s0, %s130
          %s132 = smul.u32 32, %s10
        $region28: #{tpu_custom_call.1} parent=23 // pred_fallthru
          _
      $region24: #{tpu_custom_call.1} parent=5 // pred_fallthru
        _
      %p133 = scmp.le.s32.totalorder 1, %s10
      %p134 = scmp.lt.s32.totalorder %s10, 3
      %p135 = pnand %p133, %p134
      %p136 = pneg %p135
      // Predicated region
      $region29: #{tpu_custom_call.1} parent=5 // pred_check
        _
      $region30: #{tpu_custom_call.1} parent=5 // pred_check_branch
        %138 = sbr.rel (%p135) target = $region32
      $region31: #{tpu_custom_call.1} parent=5 // pred_region
        %s139 = ssub.s32 %s10, 1
        %s140 = smul.u32 32, %s15
        %p141 = scmp.lt.s32.totalorder %s140, 63
        %s142 = scalar_select %p141, %s140, 63
        %s143 = smul.addr %s142, 8
        %s144 = scalar_lea.vmem %s0, %s143
        %p145 = pneg %p36
        %p146 = pneg %p33
        %p147 = pneg %p57
        %p148 = pneg %p54
        %p149 = pneg %p78
        %p150 = pneg %p75
        %p151 = pneg %p99
        %p152 = pneg %p96
        %s153 = smul.u32 32, %s15
        %p154 = scmp.lt.s32.totalorder %s153, 63
        %s155 = scalar_select %p154, %s153, 63
        %s156 = smul.addr %s155, 8
        %s157 = scalar_lea.vmem %s0, %s156
        %s158 = smul.u32 32, %s15
        %p159 = scmp.eq.s32.totalorder %s15, 0
        // Predicated region
        $region33: #{tpu_custom_call.1} parent=31 // pred_check
          %p160 = pneg %p159
        $region34: #{tpu_custom_call.1} parent=31 // pred_check_branch
          %162 = sbr.rel (%p160) target = $region36
        $region35: #{tpu_custom_call.1} parent=31 // pred_region
          %vm163 = vcmask 261120
          %164 = vst.msk [vmem:[#allocation2] sm:$0xff] %vm163, 0.0
        $region36: #{tpu_custom_call.1} parent=31 // pred_fallthru
          _
        %v165 = vld [vmem:[%s157] sm:$0xff]
        %v166 = vld [vmem:[%s157 + $0x8] sm:$0xff]
        %v167 = vld [vmem:[%s157 + $0x10] sm:$0xff]
        %v168 = vld [vmem:[%s157 + $0x18] sm:$0xff]
        %v169 = vld [vmem:[%s157 + $0x20] sm:$0xff]
        %v170 = vld [vmem:[%s157 + $0x28] sm:$0xff]
        %v171 = vld [vmem:[%s157 + $0x30] sm:$0xff]
        %v172 = vld [vmem:[%s157 + $0x38] sm:$0xff]
        %v173 = vld [vmem:[%s157 + $0x40] sm:$0xff]
        %v174 = vld [vmem:[%s157 + $0x48] sm:$0xff]
        %v175 = vld [vmem:[%s157 + $0x50] sm:$0xff]
        %v176 = vld [vmem:[%s157 + $0x58] sm:$0xff]
        %v177 = vld [vmem:[%s157 + $0x60] sm:$0xff]
        %v178 = vld [vmem:[%s157 + $0x68] sm:$0xff]
        %v179 = vld [vmem:[%s157 + $0x70] sm:$0xff]
        %v180 = vld [vmem:[%s157 + $0x78] sm:$0xff]
        %v181 = vld [vmem:[%s157 + $0x80] sm:$0xff]
        %v182 = vld [vmem:[%s157 + $0x88] sm:$0xff]
        %v183 = vld [vmem:[%s157 + $0x90] sm:$0xff]
        %v184 = vld [vmem:[%s157 + $0x98] sm:$0xff]
        %v185 = vld [vmem:[%s157 + $0xa0] sm:$0xff]
        %v186 = vld [vmem:[%s157 + $0xa8] sm:$0xff]
        %v187 = vld [vmem:[%s157 + $0xb0] sm:$0xff]
        %v188 = vld [vmem:[%s157 + $0xb8] sm:$0xff]
        %v189 = vld [vmem:[%s157 + $0xc0] sm:$0xff]
        %v190 = vld [vmem:[%s157 + $0xc8] sm:$0xff]
        %v191 = vld [vmem:[%s157 + $0xd0] sm:$0xff]
        %v192 = vld [vmem:[%s157 + $0xd8] sm:$0xff]
        %v193 = vld [vmem:[%s157 + $0xe0] sm:$0xff]
        %v194 = vld [vmem:[%s157 + $0xe8] sm:$0xff]
        %v195 = vld [vmem:[%s157 + $0xf0] sm:$0xff]
        %v196 = vld [vmem:[%s157 + $0xf8] sm:$0xff]
        %v197 = vld [vmem:[%s1] sm:$0xff]
        %vm198 = vcmask 64512
        %v200 = vsel %vm198, %v165, 0
        %v203 = vsel %vm198, %v166, 0
        %v206 = vsel %vm198, %v167, 0
        %v209 = vsel %vm198, %v168, 0
        %v212 = vsel %vm198, %v169, 0
        %v215 = vsel %vm198, %v170, 0
        %v218 = vsel %vm198, %v171, 0
        %v221 = vsel %vm198, %v172, 0
        %v224 = vsel %vm198, %v173, 0
        %v227 = vsel %vm198, %v174, 0
        %v230 = vsel %vm198, %v175, 0
        %v233 = vsel %vm198, %v176, 0
        %v236 = vsel %vm198, %v177, 0
        %v239 = vsel %vm198, %v178, 0
        %v242 = vsel %vm198, %v179, 0
        %v245 = vsel %vm198, %v180, 0
        %v248 = vsel %vm198, %v181, 0
        %v251 = vsel %vm198, %v182, 0
        %v254 = vsel %vm198, %v183, 0
        %v257 = vsel %vm198, %v184, 0
        %v260 = vsel %vm198, %v185, 0
        %v263 = vsel %vm198, %v186, 0
        %v266 = vsel %vm198, %v187, 0
        %v269 = vsel %vm198, %v188, 0
        %v272 = vsel %vm198, %v189, 0
        %v275 = vsel %vm198, %v190, 0
        %v278 = vsel %vm198, %v191, 0
        %v281 = vsel %vm198, %v192, 0
        %v284 = vsel %vm198, %v193, 0
        %v287 = vsel %vm198, %v194, 0
        %v290 = vsel %vm198, %v195, 0
        %v293 = vsel %vm198, %v196, 0
        %295 = vmatprep.subr.mxu0 0.0
        %296 = vmatpush1.msra.mxu0 %v197
        %297 = vmatprep.subr.mxu0 0.0
        %298 = vmatpush1.msra.mxu0 0.0
        %299 = vmatprep.subr.mxu0 0.0
        %300 = vmatpush1.msra.mxu0 0.0
        %301 = vmatprep.subr.mxu0 0.0
        %302 = vmatpush1.msra.mxu0 0.0
        %303 = vmatprep.subr.mxu0 0.0
        %304 = vmatpush1.msra.mxu0 0.0
        %305 = vmatprep.subr.mxu0 0.0
        %306 = vmatpush1.msra.mxu0 0.0
        %307 = vmatprep.subr.mxu0 0.0
        %308 = vmatpush1.msra.mxu0 0.0
        %309 = vmatprep.subr.mxu0 0.0
        %310 = vmatpush1.msra.mxu0 0.0
        %311 = vmatprep.subr.mxu0 0.0
        %312 = vmatpush1.msra.mxu0 0.0
        %313 = vmatprep.subr.mxu0 0.0
        %314 = vmatpush1.msra.mxu0 0.0
        %315 = vmatprep.subr.mxu0 0.0
        %316 = vmatpush1.msra.mxu0 0.0
        %317 = vmatprep.subr.mxu0 0.0
        %318 = vmatpush1.msra.mxu0 0.0
        %319 = vmatprep.subr.mxu0 0.0
        %320 = vmatpush1.msra.mxu0 0.0
        %321 = vmatprep.subr.mxu0 0.0
        %322 = vmatpush1.msra.mxu0 0.0
        %323 = vmatprep.subr.mxu0 0.0
        %324 = vmatpush1.msra.mxu0 0.0
        %325 = vmatprep.subr.mxu0 0.0
        %326 = vmatpush1.msra.mxu0 0.0
        %327 = vmatprep.subr.mxu0 0.0
        %328 = vmatpush1.msra.mxu0 0.0
        %329 = vmatprep.subr.mxu0 0.0
        %330 = vmatpush1.msra.mxu0 0.0
        %331 = vmatprep.subr.mxu0 0.0
        %332 = vmatpush1.msra.mxu0 0.0
        %333 = vmatprep.subr.mxu0 0.0
        %334 = vmatpush1.msra.mxu0 0.0
        %335 = vmatprep.subr.mxu0 0.0
        %336 = vmatpush1.msra.mxu0 0.0
        %337 = vmatprep.subr.mxu0 0.0
        %338 = vmatpush1.msra.mxu0 0.0
        %339 = vmatprep.subr.mxu0 0.0
        %340 = vmatpush1.msra.mxu0 0.0
        %341 = vmatprep.subr.mxu0 0.0
        %342 = vmatpush1.msra.mxu0 0.0
        %343 = vmatprep.subr.mxu0 0.0
        %344 = vmatpush1.msra.mxu0 0.0
        %345 = vmatprep.subr.mxu0 0.0
        %346 = vmatpush1.msra.mxu0 0.0
        %347 = vmatprep.subr.mxu0 0.0
        %348 = vmatpush1.msra.mxu0 0.0
        %349 = vmatprep.subr.mxu0 0.0
        %350 = vmatpush1.msra.mxu0 0.0
        %351 = vmatprep.subr.mxu0 0.0
        %352 = vmatpush1.msra.mxu0 0.0
        %353 = vmatprep.subr.mxu0 0.0
        %354 = vmatpush1.msra.mxu0 0.0
        %355 = vmatprep.subr.mxu0 0.0
        %356 = vmatpush1.msra.mxu0 0.0
        %357 = vmatprep.subr.mxu0 0.0
        %358 = vmatpush1.msra.mxu0 0.0
        %359 = vmatprep.mubr.f32.mxu0 0.0
        %360 = vmatmul.mubr.f32.gmra.mrb[0].mxu0 %v200
        %v361 = vpop.f32.mrb[0].mxu0
        %v362 = vadd.f32 0.0, %v361
        %v363 = vpop.f32.mrb[0].mxu0
        %364 = vmatprep.mubr.f32.mxu0 0.0
        %365 = vmatmul.mubr.f32.gmra.mrb[0].mxu0 %v203
        %v366 = vpop.f32.mrb[0].mxu0
        %v367 = vadd.f32 0.0, %v366
        %v368 = vpop.f32.mrb[0].mxu0
        %369 = vmatprep.mubr.f32.mxu0 0.0
        %370 = vmatmul.mubr.f32.gmra.mrb[0].mxu0 %v206
        %v371 = vpop.f32.mrb[0].mxu0
        %v372 = vadd.f32 0.0, %v371
        %v373 = vpop.f32.mrb[0].mxu0
        %374 = vmatprep.mubr.f32.mxu0 0.0
        %375 = vmatmul.mubr.f32.gmra.mrb[0].mxu0 %v209
        %v376 = vpop.f32.mrb[0].mxu0
        %v377 = vadd.f32 0.0, %v376
        %v378 = vpop.f32.mrb[0].mxu0
        %379 = vmatprep.mubr.f32.mxu0 0.0
        %380 = vmatmul.mubr.f32.gmra.mrb[0].mxu0 %v212
        %v381 = vpop.f32.mrb[0].mxu0
        %v382 = vadd.f32 0.0, %v381
        %v383 = vpop.f32.mrb[0].mxu0
        %384 = vmatprep.mubr.f32.mxu0 0.0
        %385 = vmatmul.mubr.f32.gmra.mrb[0].mxu0 %v215
        %v386 = vpop.f32.mrb[0].mxu0
        %v387 = vadd.f32 0.0, %v386
        %v388 = vpop.f32.mrb[0].mxu0
        %389 = vmatprep.mubr.f32.mxu0 0.0
        %390 = vmatmul.mubr.f32.gmra.mrb[0].mxu0 %v218
        %v391 = vpop.f32.mrb[0].mxu0
        %v392 = vadd.f32 0.0, %v391
        %v393 = vpop.f32.mrb[0].mxu0
        %394 = vmatprep.mubr.f32.mxu0 0.0
        %395 = vmatmul.mubr.f32.gmra.mrb[0].mxu0 %v221
        %v396 = vpop.f32.mrb[0].mxu0
        %v397 = vadd.f32 0.0, %v396
        %v398 = vpop.f32.mrb[0].mxu0
        %399 = vmatprep.mubr.f32.mxu0 0.0
        %400 = vmatmul.mubr.f32.gmra.mrb[0].mxu0 %v224
        %v401 = vpop.f32.mrb[0].mxu0
        %v402 = vadd.f32 0.0, %v401
        %v403 = vpop.f32.mrb[0].mxu0
        %404 = vmatprep.mubr.f32.mxu0 0.0
        %405 = vmatmul.mubr.f32.gmra.mrb[0].mxu0 %v227
        %v406 = vpop.f32.mrb[0].mxu0
        %v407 = vadd.f32 0.0, %v406
        %v408 = vpop.f32.mrb[0].mxu0
        %409 = vmatprep.mubr.f32.mxu0 0.0
        %410 = vmatmul.mubr.f32.gmra.mrb[0].mxu0 %v230
        %v411 = vpop.f32.mrb[0].mxu0
        %v412 = vadd.f32 0.0, %v411
        %v413 = vpop.f32.mrb[0].mxu0
        %414 = vmatprep.mubr.f32.mxu0 0.0
        %415 = vmatmul.mubr.f32.gmra.mrb[0].mxu0 %v233
        %v416 = vpop.f32.mrb[0].mxu0
        %v417 = vadd.f32 0.0, %v416
        %v418 = vpop.f32.mrb[0].mxu0
        %419 = vmatprep.mubr.f32.mxu0 0.0
        %420 = vmatmul.mubr.f32.gmra.mrb[0].mxu0 %v236
        %v421 = vpop.f32.mrb[0].mxu0
        %v422 = vadd.f32 0.0, %v421
        %v423 = vpop.f32.mrb[0].mxu0
        %424 = vmatprep.mubr.f32.mxu0 0.0
        %425 = vmatmul.mubr.f32.gmra.mrb[0].mxu0 %v239
        %v426 = vpop.f32.mrb[0].mxu0
        %v427 = vadd.f32 0.0, %v426
        %v428 = vpop.f32.mrb[0].mxu0
        %429 = vmatprep.mubr.f32.mxu0 0.0
        %430 = vmatmul.mubr.f32.gmra.mrb[0].mxu0 %v242
        %v431 = vpop.f32.mrb[0].mxu0
        %v432 = vadd.f32 0.0, %v431
        %v433 = vpop.f32.mrb[0].mxu0
        %434 = vmatprep.mubr.f32.mxu0 0.0
        %435 = vmatmul.mubr.f32.gmra.mrb[0].mxu0 %v245
        %v436 = vpop.f32.mrb[0].mxu0
        %v437 = vadd.f32 0.0, %v436
        %v438 = vpop.f32.mrb[0].mxu0
        %439 = vmatprep.mubr.f32.mxu0 0.0
        %440 = vmatmul.mubr.f32.gmra.mrb[0].mxu0 %v248
        %v441 = vpop.f32.mrb[0].mxu0
        %v442 = vadd.f32 0.0, %v441
        %v443 = vpop.f32.mrb[0].mxu0
        %444 = vmatprep.mubr.f32.mxu0 0.0
        %445 = vmatmul.mubr.f32.gmra.mrb[0].mxu0 %v251
        %v446 = vpop.f32.mrb[0].mxu0
        %v447 = vadd.f32 0.0, %v446
        %v448 = vpop.f32.mrb[0].mxu0
        %449 = vmatprep.mubr.f32.mxu0 0.0
        %450 = vmatmul.mubr.f32.gmra.mrb[0].mxu0 %v254
        %v451 = vpop.f32.mrb[0].mxu0
        %v452 = vadd.f32 0.0, %v451
        %v453 = vpop.f32.mrb[0].mxu0
        %454 = vmatprep.mubr.f32.mxu0 0.0
        %455 = vmatmul.mubr.f32.gmra.mrb[0].mxu0 %v257
        %v456 = vpop.f32.mrb[0].mxu0
        %v457 = vadd.f32 0.0, %v456
        %v458 = vpop.f32.mrb[0].mxu0
        %459 = vmatprep.mubr.f32.mxu0 0.0
        %460 = vmatmul.mubr.f32.gmra.mrb[0].mxu0 %v260
        %v461 = vpop.f32.mrb[0].mxu0
        %v462 = vadd.f32 0.0, %v461
        %v463 = vpop.f32.mrb[0].mxu0
        %464 = vmatprep.mubr.f32.mxu0 0.0
        %465 = vmatmul.mubr.f32.gmra.mrb[0].mxu0 %v263
        %v466 = vpop.f32.mrb[0].mxu0
        %v467 = vadd.f32 0.0, %v466
        %v468 = vpop.f32.mrb[0].mxu0
        %469 = vmatprep.mubr.f32.mxu0 0.0
        %470 = vmatmul.mubr.f32.gmra.mrb[0].mxu0 %v266
        %v471 = vpop.f32.mrb[0].mxu0
        %v472 = vadd.f32 0.0, %v471
        %v473 = vpop.f32.mrb[0].mxu0
        %474 = vmatprep.mubr.f32.mxu0 0.0
        %475 = vmatmul.mubr.f32.gmra.mrb[0].mxu0 %v269
        %v476 = vpop.f32.mrb[0].mxu0
        %v477 = vadd.f32 0.0, %v476
        %v478 = vpop.f32.mrb[0].mxu0
        %479 = vmatprep.mubr.f32.mxu0 0.0
        %480 = vmatmul.mubr.f32.gmra.mrb[0].mxu0 %v272
        %v481 = vpop.f32.mrb[0].mxu0
        %v482 = vadd.f32 0.0, %v481
        %v483 = vpop.f32.mrb[0].mxu0
        %484 = vmatprep.mubr.f32.mxu0 0.0
        %485 = vmatmul.mubr.f32.gmra.mrb[0].mxu0 %v275
        %v486 = vpop.f32.mrb[0].mxu0
        %v487 = vadd.f32 0.0, %v486
        %v488 = vpop.f32.mrb[0].mxu0
        %489 = vmatprep.mubr.f32.mxu0 0.0
        %490 = vmatmul.mubr.f32.gmra.mrb[0].mxu0 %v278
        %v491 = vpop.f32.mrb[0].mxu0
        %v492 = vadd.f32 0.0, %v491
        %v493 = vpop.f32.mrb[0].mxu0
        %494 = vmatprep.mubr.f32.mxu0 0.0
        %495 = vmatmul.mubr.f32.gmra.mrb[0].mxu0 %v281
        %v496 = vpop.f32.mrb[0].mxu0
        %v497 = vadd.f32 0.0, %v496
        %v498 = vpop.f32.mrb[0].mxu0
        %499 = vmatprep.mubr.f32.mxu0 0.0
        %500 = vmatmul.mubr.f32.gmra.mrb[0].mxu0 %v284
        %v501 = vpop.f32.mrb[0].mxu0
        %v502 = vadd.f32 0.0, %v501
        %v503 = vpop.f32.mrb[0].mxu0
        %504 = vmatprep.mubr.f32.mxu0 0.0
        %505 = vmatmul.mubr.f32.gmra.mrb[0].mxu0 %v287
        %v506 = vpop.f32.mrb[0].mxu0
        %v507 = vadd.f32 0.0, %v506
        %v508 = vpop.f32.mrb[0].mxu0
        %509 = vmatprep.mubr.f32.mxu0 0.0
        %510 = vmatmul.mubr.f32.gmra.mrb[0].mxu0 %v290
        %v511 = vpop.f32.mrb[0].mxu0
        %v512 = vadd.f32 0.0, %v511
        %v513 = vpop.f32.mrb[0].mxu0
        %514 = vmatprep.mubr.f32.mxu0 0.0
        %515 = vmatmul.mubr.f32.gmra.mrb[0].mxu0 %v293
        %v516 = vpop.f32.mrb[0].mxu0
        %v517 = vadd.f32 0.0, %v516
        %v518 = vpop.f32.mrb[0].mxu0
        %519 = vdwg.mxu0
        %v520 = vld [vmem:[%s2] sm:$0xff]
        %521 = vmatprep.subr.mxu0 0.0
        %522 = vmatpush1.msra.mxu0 %v520
        %523 = vmatprep.subr.mxu0 0.0
        %524 = vmatpush1.msra.mxu0 0.0
        %525 = vmatprep.subr.mxu0 0.0
        %526 = vmatpush1.msra.mxu0 0.0
        %527 = vmatprep.subr.mxu0 0.0
        %528 = vmatpush1.msra.mxu0 0.0
        %529 = vmatprep.subr.mxu0 0.0
        %530 = vmatpush1.msra.mxu0 0.0
        %531 = vmatprep.subr.mxu0 0.0
        %532 = vmatpush1.msra.mxu0 0.0
        %533 = vmatprep.subr.mxu0 0.0
        %534 = vmatpush1.msra.mxu0 0.0
        %535 = vmatprep.subr.mxu0 0.0
        %536 = vmatpush1.msra.mxu0 0.0
        %537 = vmatprep.subr.mxu0 0.0
        %538 = vmatpush1.msra.mxu0 0.0
        %539 = vmatprep.subr.mxu0 0.0
        %540 = vmatpush1.msra.mxu0 0.0
        %541 = vmatprep.subr.mxu0 0.0
        %542 = vmatpush1.msra.mxu0 0.0
        %543 = vmatprep.subr.mxu0 0.0
        %544 = vmatpush1.msra.mxu0 0.0
        %545 = vmatprep.subr.mxu0 0.0
        %546 = vmatpush1.msra.mxu0 0.0
        %547 = vmatprep.subr.mxu0 0.0
        %548 = vmatpush1.msra.mxu0 0.0
        %549 = vmatprep.subr.mxu0 0.0
        %550 = vmatpush1.msra.mxu0 0.0
        %551 = vmatprep.subr.mxu0 0.0
        %552 = vmatpush1.msra.mxu0 0.0
        %553 = vmatprep.subr.mxu0 0.0
        %554 = vmatpush1.msra.mxu0 0.0
        %555 = vmatprep.subr.mxu0 0.0
        %556 = vmatpush1.msra.mxu0 0.0
        %557 = vmatprep.subr.mxu0 0.0
        %558 = vmatpush1.msra.mxu0 0.0
        %559 = vmatprep.subr.mxu0 0.0
        %560 = vmatpush1.msra.mxu0 0.0
        %561 = vmatprep.subr.mxu0 0.0
        %562 = vmatpush1.msra.mxu0 0.0
        %563 = vmatprep.subr.mxu0 0.0
        %564 = vmatpush1.msra.mxu0 0.0
        %565 = vmatprep.subr.mxu0 0.0
        %566 = vmatpush1.msra.mxu0 0.0
        %567 = vmatprep.subr.mxu0 0.0
        %568 = vmatpush1.msra.mxu0 0.0
        %569 = vmatprep.subr.mxu0 0.0
        %570 = vmatpush1.msra.mxu0 0.0
        %571 = vmatprep.subr.mxu0 0.0
        %572 = vmatpush1.msra.mxu0 0.0
        %573 = vmatprep.subr.mxu0 0.0
        %574 = vmatpush1.msra.mxu0 0.0
        %575 = vmatprep.subr.mxu0 0.0
        %576 = vmatpush1.msra.mxu0 0.0
        %577 = vmatprep.subr.mxu0 0.0
        %578 = vmatpush1.msra.mxu0 0.0
        %579 = vmatprep.subr.mxu0 0.0
        %580 = vmatpush1.msra.mxu0 0.0
        %581 = vmatprep.subr.mxu0 0.0
        %582 = vmatpush1.msra.mxu0 0.0
        %583 = vmatprep.subr.mxu0 0.0
        %584 = vmatpush1.msra.mxu0 0.0
        %585 = vmatprep.mubr.f32.mxu0 0.0
        %586 = vmatmul.mubr.f32.gmra.mrb[0].mxu0 %v200
        %v587 = vpop.f32.mrb[0].mxu0
        %v588 = vadd.f32 0.0, %v587
        %v589 = vpop.f32.mrb[0].mxu0
        %590 = vmatprep.mubr.f32.mxu0 0.0
        %591 = vmatmul.mubr.f32.gmra.mrb[0].mxu0 %v203
        %v592 = vpop.f32.mrb[0].mxu0
        %v593 = vadd.f32 0.0, %v592
        %v594 = vpop.f32.mrb[0].mxu0
        %595 = vmatprep.mubr.f32.mxu0 0.0
        %596 = vmatmul.mubr.f32.gmra.mrb[0].mxu0 %v206
        %v597 = vpop.f32.mrb[0].mxu0
        %v598 = vadd.f32 0.0, %v597
        %v599 = vpop.f32.mrb[0].mxu0
        %600 = vmatprep.mubr.f32.mxu0 0.0
        %601 = vmatmul.mubr.f32.gmra.mrb[0].mxu0 %v209
        %v602 = vpop.f32.mrb[0].mxu0
        %v603 = vadd.f32 0.0, %v602
        %v604 = vpop.f32.mrb[0].mxu0
        %605 = vmatprep.mubr.f32.mxu0 0.0
        %606 = vmatmul.mubr.f32.gmra.mrb[0].mxu0 %v212
        %v607 = vpop.f32.mrb[0].mxu0
        %v608 = vadd.f32 0.0, %v607
        %v609 = vpop.f32.mrb[0].mxu0
        %610 = vmatprep.mubr.f32.mxu0 0.0
        %611 = vmatmul.mubr.f32.gmra.mrb[0].mxu0 %v215
        %v612 = vpop.f32.mrb[0].mxu0
        %v613 = vadd.f32 0.0, %v612
        %v614 = vpop.f32.mrb[0].mxu0
        %615 = vmatprep.mubr.f32.mxu0 0.0
        %616 = vmatmul.mubr.f32.gmra.mrb[0].mxu0 %v218
        %v617 = vpop.f32.mrb[0].mxu0
        %v618 = vadd.f32 0.0, %v617
        %v619 = vpop.f32.mrb[0].mxu0
        %620 = vmatprep.mubr.f32.mxu0 0.0
        %621 = vmatmul.mubr.f32.gmra.mrb[0].mxu0 %v221
        %v622 = vpop.f32.mrb[0].mxu0
        %v623 = vadd.f32 0.0, %v622
        %v624 = vpop.f32.mrb[0].mxu0
        %625 = vmatprep.mubr.f32.mxu0 0.0
        %626 = vmatmul.mubr.f32.gmra.mrb[0].mxu0 %v224
        %v627 = vpop.f32.mrb[0].mxu0
        %v628 = vadd.f32 0.0, %v627
        %v629 = vpop.f32.mrb[0].mxu0
        %630 = vmatprep.mubr.f32.mxu0 0.0
        %631 = vmatmul.mubr.f32.gmra.mrb[0].mxu0 %v227
        %v632 = vpop.f32.mrb[0].mxu0
        %v633 = vadd.f32 0.0, %v632
        %v634 = vpop.f32.mrb[0].mxu0
        %635 = vmatprep.mubr.f32.mxu0 0.0
        %636 = vmatmul.mubr.f32.gmra.mrb[0].mxu0 %v230
        %v637 = vpop.f32.mrb[0].mxu0
        %v638 = vadd.f32 0.0, %v637
        %v639 = vpop.f32.mrb[0].mxu0
        %640 = vmatprep.mubr.f32.mxu0 0.0
        %641 = vmatmul.mubr.f32.gmra.mrb[0].mxu0 %v233
        %v642 = vpop.f32.mrb[0].mxu0
        %v643 = vadd.f32 0.0, %v642
        %v644 = vpop.f32.mrb[0].mxu0
        %645 = vmatprep.mubr.f32.mxu0 0.0
        %646 = vmatmul.mubr.f32.gmra.mrb[0].mxu0 %v236
        %v647 = vpop.f32.mrb[0].mxu0
        %v648 = vadd.f32 0.0, %v647
        %v649 = vpop.f32.mrb[0].mxu0
        %650 = vmatprep.mubr.f32.mxu0 0.0
        %651 = vmatmul.mubr.f32.gmra.mrb[0].mxu0 %v239
        %v652 = vpop.f32.mrb[0].mxu0
        %v653 = vadd.f32 0.0, %v652
        %v654 = vpop.f32.mrb[0].mxu0
        %655 = vmatprep.mubr.f32.mxu0 0.0
        %656 = vmatmul.mubr.f32.gmra.mrb[0].mxu0 %v242
        %v657 = vpop.f32.mrb[0].mxu0
        %v658 = vadd.f32 0.0, %v657
        %v659 = vpop.f32.mrb[0].mxu0
        %660 = vmatprep.mubr.f32.mxu0 0.0
        %661 = vmatmul.mubr.f32.gmra.mrb[0].mxu0 %v245
        %v662 = vpop.f32.mrb[0].mxu0
        %v663 = vadd.f32 0.0, %v662
        %v664 = vpop.f32.mrb[0].mxu0
        %665 = vmatprep.mubr.f32.mxu0 0.0
        %666 = vmatmul.mubr.f32.gmra.mrb[0].mxu0 %v248
        %v667 = vpop.f32.mrb[0].mxu0
        %v668 = vadd.f32 0.0, %v667
        %v669 = vpop.f32.mrb[0].mxu0
        %670 = vmatprep.mubr.f32.mxu0 0.0
        %671 = vmatmul.mubr.f32.gmra.mrb[0].mxu0 %v251
        %v672 = vpop.f32.mrb[0].mxu0
        %v673 = vadd.f32 0.0, %v672
        %v674 = vpop.f32.mrb[0].mxu0
        %675 = vmatprep.mubr.f32.mxu0 0.0
        %676 = vmatmul.mubr.f32.gmra.mrb[0].mxu0 %v254
        %v677 = vpop.f32.mrb[0].mxu0
        %v678 = vadd.f32 0.0, %v677
        %v679 = vpop.f32.mrb[0].mxu0
        %680 = vmatprep.mubr.f32.mxu0 0.0
        %681 = vmatmul.mubr.f32.gmra.mrb[0].mxu0 %v257
        %v682 = vpop.f32.mrb[0].mxu0
        %v683 = vadd.f32 0.0, %v682
        %v684 = vpop.f32.mrb[0].mxu0
        %685 = vmatprep.mubr.f32.mxu0 0.0
        %686 = vmatmul.mubr.f32.gmra.mrb[0].mxu0 %v260
        %v687 = vpop.f32.mrb[0].mxu0
        %v688 = vadd.f32 0.0, %v687
        %v689 = vpop.f32.mrb[0].mxu0
        %690 = vmatprep.mubr.f32.mxu0 0.0
        %691 = vmatmul.mubr.f32.gmra.mrb[0].mxu0 %v263
        %v692 = vpop.f32.mrb[0].mxu0
        %v693 = vadd.f32 0.0, %v692
        %v694 = vpop.f32.mrb[0].mxu0
        %695 = vmatprep.mubr.f32.mxu0 0.0
        %696 = vmatmul.mubr.f32.gmra.mrb[0].mxu0 %v266
        %v697 = vpop.f32.mrb[0].mxu0
        %v698 = vadd.f32 0.0, %v697
        %v699 = vpop.f32.mrb[0].mxu0
        %700 = vmatprep.mubr.f32.mxu0 0.0
        %701 = vmatmul.mubr.f32.gmra.mrb[0].mxu0 %v269
        %v702 = vpop.f32.mrb[0].mxu0
        %v703 = vadd.f32 0.0, %v702
        %v704 = vpop.f32.mrb[0].mxu0
        %705 = vmatprep.mubr.f32.mxu0 0.0
        %706 = vmatmul.mubr.f32.gmra.mrb[0].mxu0 %v272
        %v707 = vpop.f32.mrb[0].mxu0
        %v708 = vadd.f32 0.0, %v707
        %v709 = vpop.f32.mrb[0].mxu0
        %710 = vmatprep.mubr.f32.mxu0 0.0
        %711 = vmatmul.mubr.f32.gmra.mrb[0].mxu0 %v275
        %v712 = vpop.f32.mrb[0].mxu0
        %v713 = vadd.f32 0.0, %v712
        %v714 = vpop.f32.mrb[0].mxu0
        %715 = vmatprep.mubr.f32.mxu0 0.0
        %716 = vmatmul.mubr.f32.gmra.mrb[0].mxu0 %v278
        %v717 = vpop.f32.mrb[0].mxu0
        %v718 = vadd.f32 0.0, %v717
        %v719 = vpop.f32.mrb[0].mxu0
        %720 = vmatprep.mubr.f32.mxu0 0.0
        %721 = vmatmul.mubr.f32.gmra.mrb[0].mxu0 %v281
        %v722 = vpop.f32.mrb[0].mxu0
        %v723 = vadd.f32 0.0, %v722
        %v724 = vpop.f32.mrb[0].mxu0
        %725 = vmatprep.mubr.f32.mxu0 0.0
        %726 = vmatmul.mubr.f32.gmra.mrb[0].mxu0 %v284
        %v727 = vpop.f32.mrb[0].mxu0
        %v728 = vadd.f32 0.0, %v727
        %v729 = vpop.f32.mrb[0].mxu0
        %730 = vmatprep.mubr.f32.mxu0 0.0
        %731 = vmatmul.mubr.f32.gmra.mrb[0].mxu0 %v287
        %v732 = vpop.f32.mrb[0].mxu0
        %v733 = vadd.f32 0.0, %v732
        %v734 = vpop.f32.mrb[0].mxu0
        %735 = vmatprep.mubr.f32.mxu0 0.0
        %736 = vmatmul.mubr.f32.gmra.mrb[0].mxu0 %v290
        %v737 = vpop.f32.mrb[0].mxu0
        %v738 = vadd.f32 0.0, %v737
        %v739 = vpop.f32.mrb[0].mxu0
        %740 = vmatprep.mubr.f32.mxu0 0.0
        %741 = vmatmul.mubr.f32.gmra.mrb[0].mxu0 %v293
        %v742 = vpop.f32.mrb[0].mxu0
        %v743 = vadd.f32 0.0, %v742
        %v744 = vpop.f32.mrb[0].mxu0
        %745 = vdwg.mxu0
        %vm746 = vcmask 261120
        %v747 = vsel %vm746, %v362, 0.0
        %v748 = vsel %vm746, %v367, 0.0
        %v749 = vadd.f32 %v747, %v748
        %v750 = vsel %vm746, %v372, 0.0
        %v751 = vadd.f32 %v749, %v750
        %v752 = vsel %vm746, %v377, 0.0
        %v753 = vadd.f32 %v751, %v752
        %v754 = vsel %vm746, %v382, 0.0
        %v755 = vadd.f32 %v753, %v754
        %v756 = vsel %vm746, %v387, 0.0
        %v757 = vadd.f32 %v755, %v756
        %v758 = vsel %vm746, %v392, 0.0
        %v759 = vadd.f32 %v757, %v758
        %v760 = vsel %vm746, %v397, 0.0
        %v761 = vadd.f32 %v759, %v760
        %v762 = vsel %vm746, %v402, 0.0
        %v763 = vadd.f32 %v761, %v762
        %v764 = vsel %vm746, %v407, 0.0
        %v765 = vadd.f32 %v763, %v764
        %v766 = vsel %vm746, %v412, 0.0
        %v767 = vadd.f32 %v765, %v766
        %v768 = vsel %vm746, %v417, 0.0
        %v769 = vadd.f32 %v767, %v768
        %v770 = vsel %vm746, %v422, 0.0
        %v771 = vadd.f32 %v769, %v770
        %v772 = vsel %vm746, %v427, 0.0
        %v773 = vadd.f32 %v771, %v772
        %v774 = vsel %vm746, %v432, 0.0
        %v775 = vadd.f32 %v773, %v774
        %v776 = vsel %vm746, %v437, 0.0
        %v777 = vadd.f32 %v775, %v776
        %v778 = vsel %vm746, %v442, 0.0
        %v779 = vadd.f32 %v777, %v778
        %v780 = vsel %vm746, %v447, 0.0
        %v781 = vadd.f32 %v779, %v780
        %v782 = vsel %vm746, %v452, 0.0
        %v783 = vadd.f32 %v781, %v782
        %v784 = vsel %vm746, %v457, 0.0
        %v785 = vadd.f32 %v783, %v784
        %v786 = vsel %vm746, %v462, 0.0
        %v787 = vadd.f32 %v785, %v786
        %v788 = vsel %vm746, %v467, 0.0
        %v789 = vadd.f32 %v787, %v788
        %v790 = vsel %vm746, %v472, 0.0
        %v791 = vadd.f32 %v789, %v790
        %v792 = vsel %vm746, %v477, 0.0
        %v793 = vadd.f32 %v791, %v792
        %v794 = vsel %vm746, %v482, 0.0
        %v795 = vadd.f32 %v793, %v794
        %v796 = vsel %vm746, %v487, 0.0
        %v797 = vadd.f32 %v795, %v796
        %v798 = vsel %vm746, %v492, 0.0
        %v799 = vadd.f32 %v797, %v798
        %v800 = vsel %vm746, %v497, 0.0
        %v801 = vadd.f32 %v799, %v800
        %v802 = vsel %vm746, %v502, 0.0
        %v803 = vadd.f32 %v801, %v802
        %v804 = vsel %vm746, %v507, 0.0
        %v805 = vadd.f32 %v803, %v804
        %v806 = vsel %vm746, %v512, 0.0
        %v807 = vadd.f32 %v805, %v806
        %v808 = vsel %vm746, %v517, 0.0
        %v809 = vadd.f32 %v807, %v808
        %v810 = vrot.slane %v809, 4
        %v811 = vadd.f32 %v809, %v810
        %v812 = vrot.slane %v811, 2
        %v813 = vadd.f32 %v811, %v812
        %v814 = vrot.slane %v813, 1
        %v815 = vadd.f32 %v813, %v814
        %v816 = vsel %vm746, %v588, 0.0
        %v817 = vsel %vm746, %v593, 0.0
        %v818 = vadd.f32 %v816, %v817
        %v819 = vsel %vm746, %v598, 0.0
        %v820 = vadd.f32 %v818, %v819
        %v821 = vsel %vm746, %v603, 0.0
        %v822 = vadd.f32 %v820, %v821
        %v823 = vsel %vm746, %v608, 0.0
        %v824 = vadd.f32 %v822, %v823
        %v825 = vsel %vm746, %v613, 0.0
        %v826 = vadd.f32 %v824, %v825
        %v827 = vsel %vm746, %v618, 0.0
        %v828 = vadd.f32 %v826, %v827
        %v829 = vsel %vm746, %v623, 0.0
        %v830 = vadd.f32 %v828, %v829
        %v831 = vsel %vm746, %v628, 0.0
        %v832 = vadd.f32 %v830, %v831
        %v833 = vsel %vm746, %v633, 0.0
        %v834 = vadd.f32 %v832, %v833
        %v835 = vsel %vm746, %v638, 0.0
        %v836 = vadd.f32 %v834, %v835
        %v837 = vsel %vm746, %v643, 0.0
        %v838 = vadd.f32 %v836, %v837
        %v839 = vsel %vm746, %v648, 0.0
        %v840 = vadd.f32 %v838, %v839
        %v841 = vsel %vm746, %v653, 0.0
        %v842 = vadd.f32 %v840, %v841
        %v843 = vsel %vm746, %v658, 0.0
        %v844 = vadd.f32 %v842, %v843
        %v845 = vsel %vm746, %v663, 0.0
        %v846 = vadd.f32 %v844, %v845
        %v847 = vsel %vm746, %v668, 0.0
        %v848 = vadd.f32 %v846, %v847
        %v849 = vsel %vm746, %v673, 0.0
        %v850 = vadd.f32 %v848, %v849
        %v851 = vsel %vm746, %v678, 0.0
        %v852 = vadd.f32 %v850, %v851
        %v853 = vsel %vm746, %v683, 0.0
        %v854 = vadd.f32 %v852, %v853
        %v855 = vsel %vm746, %v688, 0.0
        %v856 = vadd.f32 %v854, %v855
        %v857 = vsel %vm746, %v693, 0.0
        %v858 = vadd.f32 %v856, %v857
        %v859 = vsel %vm746, %v698, 0.0
        %v860 = vadd.f32 %v858, %v859
        %v861 = vsel %vm746, %v703, 0.0
        %v862 = vadd.f32 %v860, %v861
        %v863 = vsel %vm746, %v708, 0.0
        %v864 = vadd.f32 %v862, %v863
        %v865 = vsel %vm746, %v713, 0.0
        %v866 = vadd.f32 %v864, %v865
        %v867 = vsel %vm746, %v718, 0.0
        %v868 = vadd.f32 %v866, %v867
        %v869 = vsel %vm746, %v723, 0.0
        %v870 = vadd.f32 %v868, %v869
        %v871 = vsel %vm746, %v728, 0.0
        %v872 = vadd.f32 %v870, %v871
        %v873 = vsel %vm746, %v733, 0.0
        %v874 = vadd.f32 %v872, %v873
        %v875 = vsel %vm746, %v738, 0.0
        %v876 = vadd.f32 %v874, %v875
        %v877 = vsel %vm746, %v743, 0.0
        %v878 = vadd.f32 %v876, %v877
        %v879 = vrot.slane %v878, 4
        %v880 = vadd.f32 %v878, %v879
        %v881 = vrot.slane %v880, 2
        %v882 = vadd.f32 %v880, %v881
        %v883 = vrot.slane %v882, 1
        %v884 = vadd.f32 %v882, %v883
        %v885 = vmul.f32 %v362, %v362
        %v886 = vmul.f32 %v367, %v367
        %v887 = vmul.f32 %v372, %v372
        %v888 = vmul.f32 %v377, %v377
        %v889 = vmul.f32 %v382, %v382
        %v890 = vmul.f32 %v387, %v387
        %v891 = vmul.f32 %v392, %v392
        %v892 = vmul.f32 %v397, %v397
        %v893 = vmul.f32 %v402, %v402
        %v894 = vmul.f32 %v407, %v407
        %v895 = vmul.f32 %v412, %v412
        %v896 = vmul.f32 %v417, %v417
        %v897 = vmul.f32 %v422, %v422
        %v898 = vmul.f32 %v427, %v427
        %v899 = vmul.f32 %v432, %v432
        %v900 = vmul.f32 %v437, %v437
        %v901 = vmul.f32 %v442, %v442
        %v902 = vmul.f32 %v447, %v447
        %v903 = vmul.f32 %v452, %v452
        %v904 = vmul.f32 %v457, %v457
        %v905 = vmul.f32 %v462, %v462
        %v906 = vmul.f32 %v467, %v467
        %v907 = vmul.f32 %v472, %v472
        %v908 = vmul.f32 %v477, %v477
        %v909 = vmul.f32 %v482, %v482
        %v910 = vmul.f32 %v487, %v487
        %v911 = vmul.f32 %v492, %v492
        %v912 = vmul.f32 %v497, %v497
        %v913 = vmul.f32 %v502, %v502
        %v914 = vmul.f32 %v507, %v507
        %v915 = vmul.f32 %v512, %v512
        %v916 = vmul.f32 %v517, %v517
        %v917 = vsel %vm746, %v885, 0.0
        %v918 = vsel %vm746, %v886, 0.0
        %v919 = vadd.f32 %v917, %v918
        %v920 = vsel %vm746, %v887, 0.0
        %v921 = vadd.f32 %v919, %v920
        %v922 = vsel %vm746, %v888, 0.0
        %v923 = vadd.f32 %v921, %v922
        %v924 = vsel %vm746, %v889, 0.0
        %v925 = vadd.f32 %v923, %v924
        %v926 = vsel %vm746, %v890, 0.0
        %v927 = vadd.f32 %v925, %v926
        %v928 = vsel %vm746, %v891, 0.0
        %v929 = vadd.f32 %v927, %v928
        %v930 = vsel %vm746, %v892, 0.0
        %v931 = vadd.f32 %v929, %v930
        %v932 = vsel %vm746, %v893, 0.0
        %v933 = vadd.f32 %v931, %v932
        %v934 = vsel %vm746, %v894, 0.0
        %v935 = vadd.f32 %v933, %v934
        %v936 = vsel %vm746, %v895, 0.0
        %v937 = vadd.f32 %v935, %v936
        %v938 = vsel %vm746, %v896, 0.0
        %v939 = vadd.f32 %v937, %v938
        %v940 = vsel %vm746, %v897, 0.0
        %v941 = vadd.f32 %v939, %v940
        %v942 = vsel %vm746, %v898, 0.0
        %v943 = vadd.f32 %v941, %v942
        %v944 = vsel %vm746, %v899, 0.0
        %v945 = vadd.f32 %v943, %v944
        %v946 = vsel %vm746, %v900, 0.0
        %v947 = vadd.f32 %v945, %v946
        %v948 = vsel %vm746, %v901, 0.0
        %v949 = vadd.f32 %v947, %v948
        %v950 = vsel %vm746, %v902, 0.0
        %v951 = vadd.f32 %v949, %v950
        %v952 = vsel %vm746, %v903, 0.0
        %v953 = vadd.f32 %v951, %v952
        %v954 = vsel %vm746, %v904, 0.0
        %v955 = vadd.f32 %v953, %v954
        %v956 = vsel %vm746, %v905, 0.0
        %v957 = vadd.f32 %v955, %v956
        %v958 = vsel %vm746, %v906, 0.0
        %v959 = vadd.f32 %v957, %v958
        %v960 = vsel %vm746, %v907, 0.0
        %v961 = vadd.f32 %v959, %v960
        %v962 = vsel %vm746, %v908, 0.0
        %v963 = vadd.f32 %v961, %v962
        %v964 = vsel %vm746, %v909, 0.0
        %v965 = vadd.f32 %v963, %v964
        %v966 = vsel %vm746, %v910, 0.0
        %v967 = vadd.f32 %v965, %v966
        %v968 = vsel %vm746, %v911, 0.0
        %v969 = vadd.f32 %v967, %v968
        %v970 = vsel %vm746, %v912, 0.0
        %v971 = vadd.f32 %v969, %v970
        %v972 = vsel %vm746, %v913, 0.0
        %v973 = vadd.f32 %v971, %v972
        %v974 = vsel %vm746, %v914, 0.0
        %v975 = vadd.f32 %v973, %v974
        %v976 = vsel %vm746, %v915, 0.0
        %v977 = vadd.f32 %v975, %v976
        %v978 = vsel %vm746, %v916, 0.0
        %v979 = vadd.f32 %v977, %v978
        %v980 = vrot.slane %v979, 4
        %v981 = vadd.f32 %v979, %v980
        %v982 = vrot.slane %v981, 2
        %v983 = vadd.f32 %v981, %v982
        %v984 = vrot.slane %v983, 1
        %v985 = vadd.f32 %v983, %v984
        %v986 = vmul.f32 %v588, %v588
        %v987 = vmul.f32 %v593, %v593
        %v988 = vmul.f32 %v598, %v598
        %v989 = vmul.f32 %v603, %v603
        %v990 = vmul.f32 %v608, %v608
        %v991 = vmul.f32 %v613, %v613
        %v992 = vmul.f32 %v618, %v618
        %v993 = vmul.f32 %v623, %v623
        %v994 = vmul.f32 %v628, %v628
        %v995 = vmul.f32 %v633, %v633
        %v996 = vmul.f32 %v638, %v638
        %v997 = vmul.f32 %v643, %v643
        %v998 = vmul.f32 %v648, %v648
        %v999 = vmul.f32 %v653, %v653
        %v1000 = vmul.f32 %v658, %v658
        %v1001 = vmul.f32 %v663, %v663
        %v1002 = vmul.f32 %v668, %v668
        %v1003 = vmul.f32 %v673, %v673
        %v1004 = vmul.f32 %v678, %v678
        %v1005 = vmul.f32 %v683, %v683
        %v1006 = vmul.f32 %v688, %v688
        %v1007 = vmul.f32 %v693, %v693
        %v1008 = vmul.f32 %v698, %v698
        %v1009 = vmul.f32 %v703, %v703
        %v1010 = vmul.f32 %v708, %v708
        %v1011 = vmul.f32 %v713, %v713
        %v1012 = vmul.f32 %v718, %v718
        %v1013 = vmul.f32 %v723, %v723
        %v1014 = vmul.f32 %v728, %v728
        %v1015 = vmul.f32 %v733, %v733
        %v1016 = vmul.f32 %v738, %v738
        %v1017 = vmul.f32 %v743, %v743
        %v1018 = vsel %vm746, %v986, 0.0
        %v1019 = vsel %vm746, %v987, 0.0
        %v1020 = vadd.f32 %v1018, %v1019
        %v1021 = vsel %vm746, %v988, 0.0
        %v1022 = vadd.f32 %v1020, %v1021
        %v1023 = vsel %vm746, %v989, 0.0
        %v1024 = vadd.f32 %v1022, %v1023
        %v1025 = vsel %vm746, %v990, 0.0
        %v1026 = vadd.f32 %v1024, %v1025
        %v1027 = vsel %vm746, %v991, 0.0
        %v1028 = vadd.f32 %v1026, %v1027
        %v1029 = vsel %vm746, %v992, 0.0
        %v1030 = vadd.f32 %v1028, %v1029
        %v1031 = vsel %vm746, %v993, 0.0
        %v1032 = vadd.f32 %v1030, %v1031
        %v1033 = vsel %vm746, %v994, 0.0
        %v1034 = vadd.f32 %v1032, %v1033
        %v1035 = vsel %vm746, %v995, 0.0
        %v1036 = vadd.f32 %v1034, %v1035
        %v1037 = vsel %vm746, %v996, 0.0
        %v1038 = vadd.f32 %v1036, %v1037
        %v1039 = vsel %vm746, %v997, 0.0
        %v1040 = vadd.f32 %v1038, %v1039
        %v1041 = vsel %vm746, %v998, 0.0
        %v1042 = vadd.f32 %v1040, %v1041
        %v1043 = vsel %vm746, %v999, 0.0
        %v1044 = vadd.f32 %v1042, %v1043
        %v1045 = vsel %vm746, %v1000, 0.0
        %v1046 = vadd.f32 %v1044, %v1045
        %v1047 = vsel %vm746, %v1001, 0.0
        %v1048 = vadd.f32 %v1046, %v1047
        %v1049 = vsel %vm746, %v1002, 0.0
        %v1050 = vadd.f32 %v1048, %v1049
        %v1051 = vsel %vm746, %v1003, 0.0
        %v1052 = vadd.f32 %v1050, %v1051
        %v1053 = vsel %vm746, %v1004, 0.0
        %v1054 = vadd.f32 %v1052, %v1053
        %v1055 = vsel %vm746, %v1005, 0.0
        %v1056 = vadd.f32 %v1054, %v1055
        %v1057 = vsel %vm746, %v1006, 0.0
        %v1058 = vadd.f32 %v1056, %v1057
        %v1059 = vsel %vm746, %v1007, 0.0
        %v1060 = vadd.f32 %v1058, %v1059
        %v1061 = vsel %vm746, %v1008, 0.0
        %v1062 = vadd.f32 %v1060, %v1061
        %v1063 = vsel %vm746, %v1009, 0.0
        %v1064 = vadd.f32 %v1062, %v1063
        %v1065 = vsel %vm746, %v1010, 0.0
        %v1066 = vadd.f32 %v1064, %v1065
        %v1067 = vsel %vm746, %v1011, 0.0
        %v1068 = vadd.f32 %v1066, %v1067
        %v1069 = vsel %vm746, %v1012, 0.0
        %v1070 = vadd.f32 %v1068, %v1069
        %v1071 = vsel %vm746, %v1013, 0.0
        %v1072 = vadd.f32 %v1070, %v1071
        %v1073 = vsel %vm746, %v1014, 0.0
        %v1074 = vadd.f32 %v1072, %v1073
        %v1075 = vsel %vm746, %v1015, 0.0
        %v1076 = vadd.f32 %v1074, %v1075
        %v1077 = vsel %vm746, %v1016, 0.0
        %v1078 = vadd.f32 %v1076, %v1077
        %v1079 = vsel %vm746, %v1017, 0.0
        %v1080 = vadd.f32 %v1078, %v1079
        %v1081 = vrot.slane %v1080, 4
        %v1082 = vadd.f32 %v1080, %v1081
        %v1083 = vrot.slane %v1082, 2
        %v1084 = vadd.f32 %v1082, %v1083
        %v1085 = vrot.slane %v1084, 1
        %v1086 = vadd.f32 %v1084, %v1085
        %v1087 = vmul.f32 %v362, %v588
        %v1088 = vmul.f32 %v367, %v593
        %v1089 = vmul.f32 %v372, %v598
        %v1090 = vmul.f32 %v377, %v603
        %v1091 = vmul.f32 %v382, %v608
        %v1092 = vmul.f32 %v387, %v613
        %v1093 = vmul.f32 %v392, %v618
        %v1094 = vmul.f32 %v397, %v623
        %v1095 = vmul.f32 %v402, %v628
        %v1096 = vmul.f32 %v407, %v633
        %v1097 = vmul.f32 %v412, %v638
        %v1098 = vmul.f32 %v417, %v643
        %v1099 = vmul.f32 %v422, %v648
        %v1100 = vmul.f32 %v427, %v653
        %v1101 = vmul.f32 %v432, %v658
        %v1102 = vmul.f32 %v437, %v663
        %v1103 = vmul.f32 %v442, %v668
        %v1104 = vmul.f32 %v447, %v673
        %v1105 = vmul.f32 %v452, %v678
        %v1106 = vmul.f32 %v457, %v683
        %v1107 = vmul.f32 %v462, %v688
        %v1108 = vmul.f32 %v467, %v693
        %v1109 = vmul.f32 %v472, %v698
        %v1110 = vmul.f32 %v477, %v703
        %v1111 = vmul.f32 %v482, %v708
        %v1112 = vmul.f32 %v487, %v713
        %v1113 = vmul.f32 %v492, %v718
        %v1114 = vmul.f32 %v497, %v723
        %v1115 = vmul.f32 %v502, %v728
        %v1116 = vmul.f32 %v507, %v733
        %v1117 = vmul.f32 %v512, %v738
        %v1118 = vmul.f32 %v517, %v743
        %v1119 = vsel %vm746, %v1087, 0.0
        %v1120 = vsel %vm746, %v1088, 0.0
        %v1121 = vadd.f32 %v1119, %v1120
        %v1122 = vsel %vm746, %v1089, 0.0
        %v1123 = vadd.f32 %v1121, %v1122
        %v1124 = vsel %vm746, %v1090, 0.0
        %v1125 = vadd.f32 %v1123, %v1124
        %v1126 = vsel %vm746, %v1091, 0.0
        %v1127 = vadd.f32 %v1125, %v1126
        %v1128 = vsel %vm746, %v1092, 0.0
        %v1129 = vadd.f32 %v1127, %v1128
        %v1130 = vsel %vm746, %v1093, 0.0
        %v1131 = vadd.f32 %v1129, %v1130
        %v1132 = vsel %vm746, %v1094, 0.0
        %v1133 = vadd.f32 %v1131, %v1132
        %v1134 = vsel %vm746, %v1095, 0.0
        %v1135 = vadd.f32 %v1133, %v1134
        %v1136 = vsel %vm746, %v1096, 0.0
        %v1137 = vadd.f32 %v1135, %v1136
        %v1138 = vsel %vm746, %v1097, 0.0
        %v1139 = vadd.f32 %v1137, %v1138
        %v1140 = vsel %vm746, %v1098, 0.0
        %v1141 = vadd.f32 %v1139, %v1140
        %v1142 = vsel %vm746, %v1099, 0.0
        %v1143 = vadd.f32 %v1141, %v1142
        %v1144 = vsel %vm746, %v1100, 0.0
        %v1145 = vadd.f32 %v1143, %v1144
        %v1146 = vsel %vm746, %v1101, 0.0
        %v1147 = vadd.f32 %v1145, %v1146
        %v1148 = vsel %vm746, %v1102, 0.0
        %v1149 = vadd.f32 %v1147, %v1148
        %v1150 = vsel %vm746, %v1103, 0.0
        %v1151 = vadd.f32 %v1149, %v1150
        %v1152 = vsel %vm746, %v1104, 0.0
        %v1153 = vadd.f32 %v1151, %v1152
        %v1154 = vsel %vm746, %v1105, 0.0
        %v1155 = vadd.f32 %v1153, %v1154
        %v1156 = vsel %vm746, %v1106, 0.0
        %v1157 = vadd.f32 %v1155, %v1156
        %v1158 = vsel %vm746, %v1107, 0.0
        %v1159 = vadd.f32 %v1157, %v1158
        %v1160 = vsel %vm746, %v1108, 0.0
        %v1161 = vadd.f32 %v1159, %v1160
        %v1162 = vsel %vm746, %v1109, 0.0
        %v1163 = vadd.f32 %v1161, %v1162
        %v1164 = vsel %vm746, %v1110, 0.0
        %v1165 = vadd.f32 %v1163, %v1164
        %v1166 = vsel %vm746, %v1111, 0.0
        %v1167 = vadd.f32 %v1165, %v1166
        %v1168 = vsel %vm746, %v1112, 0.0
        %v1169 = vadd.f32 %v1167, %v1168
        %v1170 = vsel %vm746, %v1113, 0.0
        %v1171 = vadd.f32 %v1169, %v1170
        %v1172 = vsel %vm746, %v1114, 0.0
        %v1173 = vadd.f32 %v1171, %v1172
        %v1174 = vsel %vm746, %v1115, 0.0
        %v1175 = vadd.f32 %v1173, %v1174
        %v1176 = vsel %vm746, %v1116, 0.0
        %v1177 = vadd.f32 %v1175, %v1176
        %v1178 = vsel %vm746, %v1117, 0.0
        %v1179 = vadd.f32 %v1177, %v1178
        %v1180 = vsel %vm746, %v1118, 0.0
        %v1181 = vadd.f32 %v1179, %v1180
        %v1182 = vrot.slane %v1181, 4
        %v1183 = vadd.f32 %v1181, %v1182
        %v1184 = vrot.slane %v1183, 2
        %v1185 = vadd.f32 %v1183, %v1184
        %v1186 = vrot.slane %v1185, 1
        %v1187 = vadd.f32 %v1185, %v1186
        %v1188 = vld [vmem:[#allocation2] sm:$0xff]
        %vm1189 = vcmask 1040384
        %v1190 = vsel %vm1189, %v815, %v884
        %vm1191 = vcmask 1041408
        %v1192 = vsel %vm1191, %v1190, %v985
        %vm1193 = vcmask 1042432
        %v1194 = vsel %vm1193, %v1192, %v1086
        %vm1195 = vcmask 1043456
        %v1196 = vsel %vm1195, %v1194, %v1187
        %vm1197 = vcmask 1044480
        %v1198 = vsel %vm1197, %v1196, 0.0
        %vm1199 = vcmask 1045504
        %v1200 = vsel %vm1199, %v1198, 0.0
        %vm1201 = vcmask 1046528
        %v1202 = vsel %vm1201, %v1200, 0.0
        %v1203 = vadd.f32 %v1188, %v1202
        %1204 = vst.msk [vmem:[#allocation2] sm:$0xff] %vm746, %v1203
        // Predicated region
        $region37: #{tpu_custom_call.1} parent=31 // pred_check
          %p1205 = pneg %p96
        $region38: #{tpu_custom_call.1} parent=31 // pred_check_branch
          %1207 = sbr.rel (%p1205) target = $region40
        $region39: #{tpu_custom_call.1} parent=31 // pred_region
          %s1209 = ssub.s32 128, 128
          %1210 = vsyncadd [#allocation3], %s1209
          %s1212 = sshll.u32 [#allocation2], 4
          %s1213 = int_to_ptr.vmem [resolvable:$true] %s1212
          %1215 = dma.vmem_to_hbm [thread:$0]  %s1213, 128, %s3, [#allocation3]
        $region40: #{tpu_custom_call.1} parent=31 // pred_fallthru
          _
        // Predicated region
        $region41: #{tpu_custom_call.1} parent=31 // pred_check
          %p1216 = pneg %p96
        $region42: #{tpu_custom_call.1} parent=31 // pred_check_branch
          %1218 = sbr.rel (%p1216) target = $region44
        $region43: #{tpu_custom_call.1} parent=31 // pred_region
          %1219 = dma.done [#allocation3], 128
        $region44: #{tpu_custom_call.1} parent=31 // pred_fallthru
          _
      $region32: #{tpu_custom_call.1} parent=5 // pred_fallthru
        _
      %p1220 = scmp.le.s32.totalorder 2, %s10
      // Predicated region
      $region45: #{tpu_custom_call.1} parent=5 // pred_check
        %p1221 = pneg %p1220
      $region46: #{tpu_custom_call.1} parent=5 // pred_check_branch
        %1223 = sbr.rel (%p1221) target = $region48
      $region47: #{tpu_custom_call.1} parent=5 // pred_region
        %s1224 = ssub.s32 %s10, 2
      $region48: #{tpu_custom_call.1} parent=5 // pred_fallthru
        _
    $region6: #{tpu_custom_call.1} parent=1 // loop_footer
      %s14 = sadd.s32 1, %s10
    $region7: #{tpu_custom_call.1} parent=1 // loop_footer_branch
      %9 = sbr.rel target = $region3
    $region8: #{tpu_custom_call.1} parent=1 // loop_exit
      _
    %1225 = vsyncpa [#allocation3], 1
    %s1226 = scalar_lea.sflag [#allocation3], 1
    %1227 = vsyncpa %s1226, 1

</llo_original>
